<compile_context>
chip_gen: v6e
topology: v6e:2x2x1
jax: 0.10.0
libtpu: 0.0.40
codegen_flags: <defaults>
</compile_context>

<pallas_src>
import jax
import jax.numpy as jnp
from jax.experimental import pallas as pl
from jax.experimental.pallas import tpu as pltpu


def _gcn_kernel(adj_ref, x_ref, w1_ref, w23_ref, small_ref, pool_ref, out_ref):
    adj = adj_ref[...]                              # [N, N] bf16
    b1 = small_ref[0:1, :]                          # [1, H] f32
    b2 = small_ref[1:2, :]
    b3 = small_ref[2:3, :]
    wlin_row = small_ref[3:4, :]                    # [1, H] f32 (lin weight^T)
    blin = small_ref[4:5, 0:1]                      # [1, 1] f32 (lin bias)

    # conv1 + relu    (x @ W first — cheaper chaining than adj @ x first)
    h = jnp.dot(x_ref[...], w1_ref[...], preferred_element_type=jnp.float32)
    h = jnp.dot(adj, h.astype(jnp.bfloat16),
                preferred_element_type=jnp.float32) + b1
    h = jnp.maximum(h, 0.0)

    # conv2 + relu
    h = jnp.dot(h.astype(jnp.bfloat16), w23_ref[0, :, :],
                preferred_element_type=jnp.float32)
    h = jnp.dot(adj, h.astype(jnp.bfloat16),
                preferred_element_type=jnp.float32) + b2
    h = jnp.maximum(h, 0.0)

    # conv3 (no relu after it, per the reference forward)
    h = jnp.dot(h.astype(jnp.bfloat16), w23_ref[1, :, :],
                preferred_element_type=jnp.float32)
    h = jnp.dot(adj, h.astype(jnp.bfloat16),
                preferred_element_type=jnp.float32) + b3

    # global_max_pool, vectorized over graphs:  [G, N, H] -> [G, H]
    # NOTE: a graph id with zero member nodes would pool to finfo(f32).min.
    mask = pool_ref[...]                            # [G, N] f32
    neg = jnp.finfo(jnp.float32).min
    masked = jnp.where(mask[:, :, None] > 0.5, h[None, :, :], neg)
    pooled = jnp.max(masked, axis=1)                # [G, H] f32

    # final Linear: [G, H] * [1, H] -> lane reduce -> [G, 1]; single store.
    out_ref[...] = (jnp.sum(pooled * wlin_row, axis=-1, keepdims=True) + blin)


def _build_a_hat(edge_index, n):
    # Dense normalized adjacency with self-loops (GCNConv semantics):
    # A_hat[i, j] = 1/sqrt(d_i d_j) if edge j->i or i == j, else 0.
    # (matches PyG gcn_norm for undirected / symmetric edge_index)
    a = jnp.zeros((n, n), jnp.float32).at[edge_index[1], edge_index[0]].set(1.0)
    a = a + jnp.eye(n, dtype=jnp.float32)
    deg = jnp.sum(a, axis=1)
    dinv = 1.0 / jnp.sqrt(deg)
    return dinv[:, None] * a * dinv[None, :]


def gcn_forward(x, edge_index, batch, params, num_graphs):
    n, f_in = x.shape
    hidden = params["w1"].shape[1]

    a_hat = _build_a_hat(edge_index, n)

    # one-hot batch membership mask, graph-major [G, N] (no transpose in-kernel)
    pool = (jnp.arange(num_graphs)[:, None] == batch[None, :]).astype(jnp.float32)

    # zero-pad F_in to a multiple of 128 (exact: zeros add nothing to the
    # contraction) and cast the MXU operands to bf16.
    f_pad = (-f_in) % 128
    x_p = jnp.pad(x, ((0, 0), (0, f_pad))).astype(jnp.bfloat16)
    w1_p = jnp.pad(params["w1"], ((0, f_pad), (0, 0))).astype(jnp.bfloat16)
    w23 = jnp.stack([params["w2"], params["w3"]], axis=0).astype(jnp.bfloat16)
    adj_bf16 = a_hat.astype(jnp.bfloat16)

    # pack ALL small f32 params into one array -> a single tiny DMA.
    small = jnp.zeros((5, hidden), jnp.float32)
    small = small.at[0, :].set(params["b1"][0])
    small = small.at[1, :].set(params["b2"][0])
    small = small.at[2, :].set(params["b3"][0])
    small = small.at[3, :].set(params["wlin"][:, 0])
    small = small.at[4, 0].set(params["blin"][0, 0])

    vmem = pl.BlockSpec(memory_space=pltpu.MemorySpace.VMEM)

    # TODO(synk): for large N, tile a_hat / h with a grid (or switch to a
    # sparse gather aggregation) instead of keeping the dense [N,N] resident.
    return pl.pallas_call(
        _gcn_kernel,
        out_shape=jax.ShapeDtypeStruct((num_graphs, 1), jnp.float32),
        in_specs=[vmem,   # adj (bf16)
                  vmem,   # x (padded, bf16)
                  vmem,   # w1 (padded, bf16)
                  vmem,   # w2/w3 stacked (bf16)
                  vmem,   # packed small f32 params
                  vmem],  # pool mask
        out_specs=vmem,
    )(adj_bf16, x_p, w1_p, w23, small, pool)


def _reference(x, edge_index, batch, params, num_graphs):
    """Plain-JAX reference with the same bf16 casting as the kernel."""
    n = x.shape[0]
    adj = _build_a_hat(edge_index, n).astype(jnp.bfloat16)

    def conv(h, w, b):
        z = jnp.dot(h.astype(jnp.bfloat16), w.astype(jnp.bfloat16),
                    preferred_element_type=jnp.float32)
        return jnp.dot(adj, z.astype(jnp.bfloat16),
                       preferred_element_type=jnp.float32) + b

    h = jnp.maximum(conv(x, params["w1"], params["b1"]), 0.0)
    h = jnp.maximum(conv(h, params["w2"], params["b2"]), 0.0)
    h = conv(h, params["w3"], params["b3"])

    mask = (jnp.arange(num_graphs)[:, None] == batch[None, :])
    neg = jnp.finfo(jnp.float32).min
    pooled = jnp.max(jnp.where(mask[:, :, None], h[None, :, :], neg), axis=1)
    return jnp.dot(pooled, params["wlin"],
                   preferred_element_type=jnp.float32) + params["blin"]


def init_params(key, in_channels, hidden_channels):
    ks = jax.random.split(key, 4)

    def glorot(k, shape):
        scale = jnp.sqrt(2.0 / (shape[0] + shape[1]))
        return jax.random.normal(k, shape, jnp.float32) * scale

    return {
        "w1": glorot(ks[0], (in_channels, hidden_channels)),
        "b1": jnp.zeros((1, hidden_channels), jnp.float32),
        "w2": glorot(ks[1], (hidden_channels, hidden_channels)),
        "b2": jnp.zeros((1, hidden_channels), jnp.float32),
        "w3": glorot(ks[2], (hidden_channels, hidden_channels)),
        "b3": jnp.zeros((1, hidden_channels), jnp.float32),
        "wlin": glorot(ks[3], (hidden_channels, 1)),
        "blin": jnp.zeros((1, 1), jnp.float32),
    }


if __name__ == "__main__":
    N_NODES = 16          # 2 graphs x 8 nodes
    F_IN = 818            # fixed by the module (GCNConv(818, hidden))
    HIDDEN = 32
    NUM_GRAPHS = 2

    key = jax.random.PRNGKey(0)
    k_x, k_p = jax.random.split(key)

    x = jax.random.normal(k_x, (N_NODES, F_IN), jnp.float32)

    # two ring graphs of 8 nodes each, symmetric (undirected) edges
    src, dst = [], []
    nodes_per_graph = N_NODES // NUM_GRAPHS
    for g in range(NUM_GRAPHS):
        off = g * nodes_per_graph
        for i in range(nodes_per_graph):
            a, b = off + i, off + (i + 1) % nodes_per_graph
            src += [a, b]
            dst += [b, a]
    edge_index = jnp.array([src, dst], dtype=jnp.int32)   # [2, E]
    batch = jnp.array([0] * nodes_per_graph + [1] * nodes_per_graph,
                      dtype=jnp.int32)

    params = init_params(k_p, F_IN, HIDDEN)

    out = gcn_forward(x, edge_index, batch, params, NUM_GRAPHS)
    out = jax.block_until_ready(out)
    assert out.shape == (NUM_GRAPHS, 1)

    ref = jax.block_until_ready(
        _reference(x, edge_index, batch, params, NUM_GRAPHS))
    assert bool(jnp.all(jnp.isfinite(out)))
    assert bool(jnp.allclose(out, ref, rtol=1e-2, atol=1e-2)), (out, ref)

    print("KERNEL_OK")
</pallas_src>

<mosaic_0001>
module attributes {stable_mosaic.version = 11 : i64} {
  func.func @_gcn_kernel(%arg0: memref<16x16xbf16, #tpu.memory_space<vmem>>, %arg1: memref<16x896xbf16, #tpu.memory_space<vmem>>, %arg2: memref<896x32xbf16, #tpu.memory_space<vmem>>, %arg3: memref<2x32x32xbf16, #tpu.memory_space<vmem>>, %arg4: memref<5x32xf32, #tpu.memory_space<vmem>>, %arg5: memref<2x16xf32, #tpu.memory_space<vmem>>, %arg6: memref<2x1xf32, #tpu.memory_space<vmem>>) attributes {dimension_semantics = [], scalar_prefetch = 0 : i64, scratch_operands = 0 : i64, tpu.core_type = #tpu.core_type<tc>} {
    %c0 = arith.constant 0 : index
    %c0_0 = arith.constant 0 : index
    %0 = vector.load %arg0[%c0, %c0_0] : memref<16x16xbf16, #tpu.memory_space<vmem>>, vector<16x16xbf16>
    %c0_1 = arith.constant 0 : index
    %c0_2 = arith.constant 0 : index
    %1 = vector.load %arg4[%c0_1, %c0_2] : memref<5x32xf32, #tpu.memory_space<vmem>>, vector<1x32xf32>
    %c1 = arith.constant 1 : index
    %c0_3 = arith.constant 0 : index
    %2 = vector.load %arg4[%c1, %c0_3] : memref<5x32xf32, #tpu.memory_space<vmem>>, vector<1x32xf32>
    %c2 = arith.constant 2 : index
    %c0_4 = arith.constant 0 : index
    %3 = vector.load %arg4[%c2, %c0_4] : memref<5x32xf32, #tpu.memory_space<vmem>>, vector<1x32xf32>
    %c3 = arith.constant 3 : index
    %c0_5 = arith.constant 0 : index
    %4 = vector.load %arg4[%c3, %c0_5] : memref<5x32xf32, #tpu.memory_space<vmem>>, vector<1x32xf32>
    %c4 = arith.constant 4 : index
    %c0_6 = arith.constant 0 : index
    %5 = vector.load %arg4[%c4, %c0_6] : memref<5x32xf32, #tpu.memory_space<vmem>>, vector<1x1xf32>
    %c0_7 = arith.constant 0 : index
    %c0_8 = arith.constant 0 : index
    %6 = vector.load %arg1[%c0_7, %c0_8] : memref<16x896xbf16, #tpu.memory_space<vmem>>, vector<16x896xbf16>
    %c0_9 = arith.constant 0 : index
    %c0_10 = arith.constant 0 : index
    %7 = vector.load %arg2[%c0_9, %c0_10] : memref<896x32xbf16, #tpu.memory_space<vmem>>, vector<896x32xbf16>
    %cst = arith.constant dense<0.000000e+00> : vector<16x32xf32>
    %8 = tpu.matmul %6, %7, %cst {dimension_numbers = #tpu.dot_dimension_numbers<[1], [0], [0], [1], [0, 0, 1, 1], [], []>} : vector<16x896xbf16>, vector<896x32xbf16>, vector<16x32xf32> -> vector<16x32xf32>
    %9 = arith.truncf %8 : vector<16x32xf32> to vector<16x32xbf16>
    %cst_11 = arith.constant dense<0.000000e+00> : vector<16x32xf32>
    %10 = tpu.matmul %0, %9, %cst_11 {dimension_numbers = #tpu.dot_dimension_numbers<[1], [0], [0], [1], [0, 0, 1, 1], [], []>} : vector<16x16xbf16>, vector<16x32xbf16>, vector<16x32xf32> -> vector<16x32xf32>
    %11 = vector.broadcast %1 : vector<1x32xf32> to vector<16x32xf32>
    %12 = arith.addf %10, %11 : vector<16x32xf32>
    %cst_12 = arith.constant 0.000000e+00 : f32
    %13 = vector.broadcast %cst_12 : f32 to vector<16x32xf32>
    %14 = arith.maximumf %12, %13 : vector<16x32xf32>
    %15 = arith.truncf %14 : vector<16x32xf32> to vector<16x32xbf16>
    %c0_13 = arith.constant 0 : index
    %c0_14 = arith.constant 0 : index
    %c0_15 = arith.constant 0 : index
    %16 = vector.load %arg3[%c0_13, %c0_14, %c0_15] : memref<2x32x32xbf16, #tpu.memory_space<vmem>>, vector<1x32x32xbf16>
    %17 = vector.shape_cast %16 : vector<1x32x32xbf16> to vector<32x32xbf16>
    %cst_16 = arith.constant dense<0.000000e+00> : vector<16x32xf32>
    %18 = tpu.matmul %15, %17, %cst_16 {dimension_numbers = #tpu.dot_dimension_numbers<[1], [0], [0], [1], [0, 0, 1, 1], [], []>} : vector<16x32xbf16>, vector<32x32xbf16>, vector<16x32xf32> -> vector<16x32xf32>
    %19 = arith.truncf %18 : vector<16x32xf32> to vector<16x32xbf16>
    %cst_17 = arith.constant dense<0.000000e+00> : vector<16x32xf32>
    %20 = tpu.matmul %0, %19, %cst_17 {dimension_numbers = #tpu.dot_dimension_numbers<[1], [0], [0], [1], [0, 0, 1, 1], [], []>} : vector<16x16xbf16>, vector<16x32xbf16>, vector<16x32xf32> -> vector<16x32xf32>
    %21 = vector.broadcast %2 : vector<1x32xf32> to vector<16x32xf32>
    %22 = arith.addf %20, %21 : vector<16x32xf32>
    %cst_18 = arith.constant 0.000000e+00 : f32
    %23 = vector.broadcast %cst_18 : f32 to vector<16x32xf32>
    %24 = arith.maximumf %22, %23 : vector<16x32xf32>
    %25 = arith.truncf %24 : vector<16x32xf32> to vector<16x32xbf16>
    %c1_19 = arith.constant 1 : index
    %c0_20 = arith.constant 0 : index
    %c0_21 = arith.constant 0 : index
    %26 = vector.load %arg3[%c1_19, %c0_20, %c0_21] : memref<2x32x32xbf16, #tpu.memory_space<vmem>>, vector<1x32x32xbf16>
    %27 = vector.shape_cast %26 : vector<1x32x32xbf16> to vector<32x32xbf16>
    %cst_22 = arith.constant dense<0.000000e+00> : vector<16x32xf32>
    %28 = tpu.matmul %25, %27, %cst_22 {dimension_numbers = #tpu.dot_dimension_numbers<[1], [0], [0], [1], [0, 0, 1, 1], [], []>} : vector<16x32xbf16>, vector<32x32xbf16>, vector<16x32xf32> -> vector<16x32xf32>
    %29 = arith.truncf %28 : vector<16x32xf32> to vector<16x32xbf16>
    %cst_23 = arith.constant dense<0.000000e+00> : vector<16x32xf32>
    %30 = tpu.matmul %0, %29, %cst_23 {dimension_numbers = #tpu.dot_dimension_numbers<[1], [0], [0], [1], [0, 0, 1, 1], [], []>} : vector<16x16xbf16>, vector<16x32xbf16>, vector<16x32xf32> -> vector<16x32xf32>
    %31 = vector.broadcast %3 : vector<1x32xf32> to vector<16x32xf32>
    %32 = arith.addf %30, %31 : vector<16x32xf32>
    %c0_24 = arith.constant 0 : index
    %c0_25 = arith.constant 0 : index
    %33 = vector.load %arg5[%c0_24, %c0_25] : memref<2x16xf32, #tpu.memory_space<vmem>>, vector<2x16xf32>
    %34 = vector.shape_cast %33 : vector<2x16xf32> to vector<2x16x1xf32>
    %cst_26 = arith.constant 5.000000e-01 : f32
    %35 = vector.broadcast %cst_26 : f32 to vector<2x16x1xf32>
    %36 = arith.cmpf ogt, %34, %35 : vector<2x16x1xf32>
    %37 = vector.shape_cast %32 : vector<16x32xf32> to vector<1x16x32xf32>
    %cst_27 = arith.constant -3.40282347E+38 : f32
    %38 = vector.shape_cast %36 : vector<2x16x1xi1> to vector<2x16x1xi1>
    %39 = vector.broadcast %38 : vector<2x16x1xi1> to vector<2x16x32xi1>
    %40 = vector.shape_cast %37 : vector<1x16x32xf32> to vector<1x16x32xf32>
    %41 = vector.broadcast %40 : vector<1x16x32xf32> to vector<2x16x32xf32>
    %42 = vector.broadcast %cst_27 : f32 to vector<2x16x32xf32>
    %43 = arith.select %39, %41, %42 : vector<2x16x32xi1>, vector<2x16x32xf32>
    %cst_28 = arith.constant dense<0xFF800000> : vector<2x32xf32>
    %44 = vector.multi_reduction <maximumf>, %43, %cst_28 [1] : vector<2x16x32xf32> to vector<2x32xf32>
    %45 = vector.broadcast %4 : vector<1x32xf32> to vector<2x32xf32>
    %46 = arith.mulf %44, %45 : vector<2x32xf32>
    %cst_29 = arith.constant dense<0.000000e+00> : vector<2xf32>
    %47 = vector.multi_reduction <add>, %46, %cst_29 [1] : vector<2x32xf32> to vector<2xf32>
    %48 = vector.shape_cast %47 : vector<2xf32> to vector<2x1xf32>
    %49 = vector.broadcast %5 : vector<1x1xf32> to vector<2x1xf32>
    %50 = arith.addf %48, %49 : vector<2x1xf32>
    %c0_30 = arith.constant 0 : index
    %c0_31 = arith.constant 0 : index
    %51 = vector.load %arg6[%c0_30, %c0_31] : memref<2x1xf32, #tpu.memory_space<vmem>>, vector<2x1xf32>
    tpu.vector_store %arg6[%c0_30, %c0_31], %50 {strides = array<i32>} : memref<2x1xf32, #tpu.memory_space<vmem>>, vector<2x1xf32>,
    return
  }
}

</mosaic_0001>

<llo_original>
// kernel: tpu_custom_call.1
$region0: #{tpu_custom_call.1}
  #allocation0 [shape = 'u32[]', space=smem, size = 0x4, offset = 0x4, fixed_abs, tag = 'smem constant byte address 0x4 - core index']
  #allocation1 [shape = 'u32[144,128]{1,0:T(1,128)}', space=vmem, size = 0x12000, scoped, tag = 'internal scratch']
  %s0 = inlined_call_operand.vmem [shape: bf16[16,16], index: 0, kind: input, shape index: {}]
  %s1 = inlined_call_operand.vmem [shape: bf16[16,896], index: 1, kind: input, shape index: {}]
  %s2 = inlined_call_operand.vmem [shape: bf16[896,32], index: 2, kind: input, shape index: {}]
  %s3 = inlined_call_operand.vmem [shape: bf16[2,32,32], index: 3, kind: input, shape index: {}]
  %s4 = inlined_call_operand.vmem [shape: f32[5,32], index: 4, kind: input, shape index: {}]
  %s5 = inlined_call_operand.vmem [shape: f32[2,16], index: 5, kind: input, shape index: {}]
  %s6 = inlined_call_operand.vmem [shape: f32[2,1], index: 6, kind: output, shape index: {}]
  %s7 = sld [smem:[#allocation0]]
  $region34: #{tpu_custom_call.1} parent=0
    _
  %s9 = ssub.s32 1, %s7
  %s10 = scalar_select 0, %s9, %s7
  // Predicated region
  $region2: #{tpu_custom_call.1} parent=0 // pred_check
    _
  $region3: #{tpu_custom_call.1} parent=0 // pred_check_branch
    %12 = sbr.rel (0) target = $region5
  $region4: #{tpu_custom_call.1} parent=0 // pred_region
    _
  $region5: #{tpu_custom_call.1} parent=0 // pred_fallthru
    _
  // Predicated region
  $region6: #{tpu_custom_call.1} parent=0 // pred_check
    _
  $region7: #{tpu_custom_call.1} parent=0 // pred_check_branch
    %14 = sbr.rel (0) target = $region9
  $region8: #{tpu_custom_call.1} parent=0 // pred_region
    _
  $region9: #{tpu_custom_call.1} parent=0 // pred_fallthru
    _
  // Predicated region
  $region10: #{tpu_custom_call.1} parent=0 // pred_check
    _
  $region11: #{tpu_custom_call.1} parent=0 // pred_check_branch
    %16 = sbr.rel (0) target = $region13
  $region12: #{tpu_custom_call.1} parent=0 // pred_region
    _
  $region13: #{tpu_custom_call.1} parent=0 // pred_fallthru
    _
  // Predicated region
  $region14: #{tpu_custom_call.1} parent=0 // pred_check
    _
  $region15: #{tpu_custom_call.1} parent=0 // pred_check_branch
    %18 = sbr.rel (0) target = $region17
  $region16: #{tpu_custom_call.1} parent=0 // pred_region
    _
  $region17: #{tpu_custom_call.1} parent=0 // pred_fallthru
    _
  // Predicated region
  $region18: #{tpu_custom_call.1} parent=0 // pred_check
    _
  $region19: #{tpu_custom_call.1} parent=0 // pred_check_branch
    %20 = sbr.rel (0) target = $region21
  $region20: #{tpu_custom_call.1} parent=0 // pred_region
    _
  $region21: #{tpu_custom_call.1} parent=0 // pred_fallthru
    _
  // Predicated region
  $region22: #{tpu_custom_call.1} parent=0 // pred_check
    _
  $region23: #{tpu_custom_call.1} parent=0 // pred_check_branch
    %22 = sbr.rel (0) target = $region25
  $region24: #{tpu_custom_call.1} parent=0 // pred_region
    _
  $region25: #{tpu_custom_call.1} parent=0 // pred_fallthru
    _
  %v24 = vld [vmem:[%s0] sm:$0xf]
  %v25 = vld [vmem:[%s0 + $0x4] sm:$0xf]
  %v26 = vld [vmem:[%s4] sm:$0x1]
  %v27 = vld [vmem:[%s4 + $0x1] sm:$0x1]
  %v28 = vld [vmem:[%s4 + $0x2] sm:$0x1]
  %v29 = vld [vmem:[%s4 + $0x3] sm:$0x1]
  %v30 = vld [vmem:[%s4 + $0x4] sm:$0x1]
  %v31 = vld [vmem:[%s1] sm:$0xff]
  %v32 = vld [vmem:[%s1 + $0x8] sm:$0xff]
  %v33 = vld [vmem:[%s1 + $0x10] sm:$0xff]
  %v34 = vld [vmem:[%s1 + $0x18] sm:$0xf]
  %v35 = vld [vmem:[%s1 + $0x1c] sm:$0xff]
  %v36 = vld [vmem:[%s1 + $0x24] sm:$0xff]
  %v37 = vld [vmem:[%s1 + $0x2c] sm:$0xff]
  %v38 = vld [vmem:[%s1 + $0x34] sm:$0xf]
  %v39 = vld [vmem:[%s2] sm:$0xf]
  %v40 = vld [vmem:[%s2 + $0x4] sm:$0xf]
  %v41 = vld [vmem:[%s2 + $0x8] sm:$0xf]
  %v42 = vld [vmem:[%s2 + $0xc] sm:$0xf]
  %v43 = vld [vmem:[%s2 + $0x10] sm:$0xf]
  %v44 = vld [vmem:[%s2 + $0x14] sm:$0xf]
  %v45 = vld [vmem:[%s2 + $0x18] sm:$0xf]
  %v46 = vld [vmem:[%s2 + $0x1c] sm:$0xf]
  %v47 = vld [vmem:[%s2 + $0x20] sm:$0xf]
  %v48 = vld [vmem:[%s2 + $0x24] sm:$0xf]
  %v49 = vld [vmem:[%s2 + $0x28] sm:$0xf]
  %v50 = vld [vmem:[%s2 + $0x2c] sm:$0xf]
  %v51 = vld [vmem:[%s2 + $0x30] sm:$0xf]
  %v52 = vld [vmem:[%s2 + $0x34] sm:$0xf]
  %v53 = vld [vmem:[%s2 + $0x38] sm:$0xf]
  %v54 = vld [vmem:[%s2 + $0x3c] sm:$0xf]
  %v55 = vld [vmem:[%s2 + $0x40] sm:$0xf]
  %v56 = vld [vmem:[%s2 + $0x44] sm:$0xf]
  %v57 = vld [vmem:[%s2 + $0x48] sm:$0xf]
  %v58 = vld [vmem:[%s2 + $0x4c] sm:$0xf]
  %v59 = vld [vmem:[%s2 + $0x50] sm:$0xf]
  %v60 = vld [vmem:[%s2 + $0x54] sm:$0xf]
  %v61 = vld [vmem:[%s2 + $0x58] sm:$0xf]
  %v62 = vld [vmem:[%s2 + $0x5c] sm:$0xf]
  %v63 = vld [vmem:[%s2 + $0x60] sm:$0xf]
  %v64 = vld [vmem:[%s2 + $0x64] sm:$0xf]
  %v65 = vld [vmem:[%s2 + $0x68] sm:$0xf]
  %v66 = vld [vmem:[%s2 + $0x6c] sm:$0xf]
  %v67 = vld [vmem:[%s2 + $0x70] sm:$0xf]
  %v68 = vld [vmem:[%s2 + $0x74] sm:$0xf]
  %v69 = vld [vmem:[%s2 + $0x78] sm:$0xf]
  %v70 = vld [vmem:[%s2 + $0x7c] sm:$0xf]
  %v71 = vld [vmem:[%s2 + $0x80] sm:$0xf]
  %v72 = vld [vmem:[%s2 + $0x84] sm:$0xf]
  %v73 = vld [vmem:[%s2 + $0x88] sm:$0xf]
  %v74 = vld [vmem:[%s2 + $0x8c] sm:$0xf]
  %v75 = vld [vmem:[%s2 + $0x90] sm:$0xf]
  %v76 = vld [vmem:[%s2 + $0x94] sm:$0xf]
  %v77 = vld [vmem:[%s2 + $0x98] sm:$0xf]
  %v78 = vld [vmem:[%s2 + $0x9c] sm:$0xf]
  %v79 = vld [vmem:[%s2 + $0xa0] sm:$0xf]
  %v80 = vld [vmem:[%s2 + $0xa4] sm:$0xf]
  %v81 = vld [vmem:[%s2 + $0xa8] sm:$0xf]
  %v82 = vld [vmem:[%s2 + $0xac] sm:$0xf]
  %v83 = vld [vmem:[%s2 + $0xb0] sm:$0xf]
  %v84 = vld [vmem:[%s2 + $0xb4] sm:$0xf]
  %v85 = vld [vmem:[%s2 + $0xb8] sm:$0xf]
  %v86 = vld [vmem:[%s2 + $0xbc] sm:$0xf]
  %v87 = vld [vmem:[%s2 + $0xc0] sm:$0xf]
  %v88 = vld [vmem:[%s2 + $0xc4] sm:$0xf]
  %v89 = vld [vmem:[%s2 + $0xc8] sm:$0xf]
  %v90 = vld [vmem:[%s2 + $0xcc] sm:$0xf]
  %v91 = vld [vmem:[%s2 + $0xd0] sm:$0xf]
  %v92 = vld [vmem:[%s2 + $0xd4] sm:$0xf]
  %v93 = vld [vmem:[%s2 + $0xd8] sm:$0xf]
  %v94 = vld [vmem:[%s2 + $0xdc] sm:$0xf]
  %v95 = vld [vmem:[%s2 + $0xe0] sm:$0xf]
  %v96 = vld [vmem:[%s2 + $0xe4] sm:$0xf]
  %v97 = vld [vmem:[%s2 + $0xe8] sm:$0xf]
  %v98 = vld [vmem:[%s2 + $0xec] sm:$0xf]
  %v99 = vld [vmem:[%s2 + $0xf0] sm:$0xf]
  %v100 = vld [vmem:[%s2 + $0xf4] sm:$0xf]
  %v101 = vld [vmem:[%s2 + $0xf8] sm:$0xf]
  %v102 = vld [vmem:[%s2 + $0xfc] sm:$0xf]
  %v103 = vld [vmem:[%s2 + $0x100] sm:$0xf]
  %v104 = vld [vmem:[%s2 + $0x104] sm:$0xf]
  %v105 = vld [vmem:[%s2 + $0x108] sm:$0xf]
  %v106 = vld [vmem:[%s2 + $0x10c] sm:$0xf]
  %v107 = vld [vmem:[%s2 + $0x110] sm:$0xf]
  %v108 = vld [vmem:[%s2 + $0x114] sm:$0xf]
  %v109 = vld [vmem:[%s2 + $0x118] sm:$0xf]
  %v110 = vld [vmem:[%s2 + $0x11c] sm:$0xf]
  %v111 = vld [vmem:[%s2 + $0x120] sm:$0xf]
  %v112 = vld [vmem:[%s2 + $0x124] sm:$0xf]
  %v113 = vld [vmem:[%s2 + $0x128] sm:$0xf]
  %v114 = vld [vmem:[%s2 + $0x12c] sm:$0xf]
  %v115 = vld [vmem:[%s2 + $0x130] sm:$0xf]
  %v116 = vld [vmem:[%s2 + $0x134] sm:$0xf]
  %v117 = vld [vmem:[%s2 + $0x138] sm:$0xf]
  %v118 = vld [vmem:[%s2 + $0x13c] sm:$0xf]
  %v119 = vld [vmem:[%s2 + $0x140] sm:$0xf]
  %v120 = vld [vmem:[%s2 + $0x144] sm:$0xf]
  %v121 = vld [vmem:[%s2 + $0x148] sm:$0xf]
  %v122 = vld [vmem:[%s2 + $0x14c] sm:$0xf]
  %v123 = vld [vmem:[%s2 + $0x150] sm:$0xf]
  %v124 = vld [vmem:[%s2 + $0x154] sm:$0xf]
  %v125 = vld [vmem:[%s2 + $0x158] sm:$0xf]
  %v126 = vld [vmem:[%s2 + $0x15c] sm:$0xf]
  %v127 = vld [vmem:[%s2 + $0x160] sm:$0xf]
  %v128 = vld [vmem:[%s2 + $0x164] sm:$0xf]
  %v129 = vld [vmem:[%s2 + $0x168] sm:$0xf]
  %v130 = vld [vmem:[%s2 + $0x16c] sm:$0xf]
  %v131 = vld [vmem:[%s2 + $0x170] sm:$0xf]
  %v132 = vld [vmem:[%s2 + $0x174] sm:$0xf]
  %v133 = vld [vmem:[%s2 + $0x178] sm:$0xf]
  %v134 = vld [vmem:[%s2 + $0x17c] sm:$0xf]
  %v135 = vld [vmem:[%s2 + $0x180] sm:$0xf]
  %v136 = vld [vmem:[%s2 + $0x184] sm:$0xf]
  %v137 = vld [vmem:[%s2 + $0x188] sm:$0xf]
  %v138 = vld [vmem:[%s2 + $0x18c] sm:$0xf]
  %v139 = vld [vmem:[%s2 + $0x190] sm:$0xf]
  %v140 = vld [vmem:[%s2 + $0x194] sm:$0xf]
  %v141 = vld [vmem:[%s2 + $0x198] sm:$0xf]
  %v142 = vld [vmem:[%s2 + $0x19c] sm:$0xf]
  %v143 = vld [vmem:[%s2 + $0x1a0] sm:$0xf]
  %v144 = vld [vmem:[%s2 + $0x1a4] sm:$0xf]
  %v145 = vld [vmem:[%s2 + $0x1a8] sm:$0xf]
  %v146 = vld [vmem:[%s2 + $0x1ac] sm:$0xf]
  %v147 = vld [vmem:[%s2 + $0x1b0] sm:$0xf]
  %v148 = vld [vmem:[%s2 + $0x1b4] sm:$0xf]
  %v149 = vld [vmem:[%s2 + $0x1b8] sm:$0xf]
  %v150 = vld [vmem:[%s2 + $0x1bc] sm:$0xf]
  %v159 = vunpack.c.l.b16 %v31
  %v160 = vunpack.c.h.b16 %v31
  %v161 = vunpack.c.l.b16 %v32
  %v162 = vunpack.c.h.b16 %v32
  %v163 = vunpack.c.l.b16 %v33
  %v164 = vunpack.c.h.b16 %v33
  %v165 = vunpack.c.l.b16 %v34
  %v166 = vunpack.c.l.b16 %v35
  %v167 = vunpack.c.h.b16 %v35
  %v168 = vunpack.c.l.b16 %v36
  %v169 = vunpack.c.h.b16 %v36
  %v170 = vunpack.c.l.b16 %v37
  %v171 = vunpack.c.h.b16 %v37
  %v172 = vunpack.c.l.b16 %v38
  %v173 = vpack.c.b16 %v166, %v159
  %v174 = vpack.c.b16 %v167, %v160
  %v175 = vpack.c.b16 %v168, %v161
  %v176 = vpack.c.b16 %v169, %v162
  %v177 = vpack.c.b16 %v170, %v163
  %v178 = vpack.c.b16 %v171, %v164
  %v179 = vpack.c.b16 %v172, %v165
  %v299 = vunpack.c.l.b16 %v39
  %v300 = vunpack.c.l.b16 %v40
  %v301 = vunpack.c.l.b16 %v41
  %v302 = vunpack.c.l.b16 %v42
  %v303 = vunpack.c.l.b16 %v43
  %v304 = vunpack.c.l.b16 %v44
  %v305 = vunpack.c.l.b16 %v45
  %v306 = vunpack.c.l.b16 %v46
  %v307 = vunpack.c.l.b16 %v47
  %v308 = vunpack.c.l.b16 %v48
  %v309 = vunpack.c.l.b16 %v49
  %v310 = vunpack.c.l.b16 %v50
  %v311 = vunpack.c.l.b16 %v51
  %v312 = vunpack.c.l.b16 %v52
  %v313 = vunpack.c.l.b16 %v53
  %v314 = vunpack.c.l.b16 %v54
  %v315 = vunpack.c.l.b16 %v55
  %v316 = vunpack.c.l.b16 %v56
  %v317 = vunpack.c.l.b16 %v57
  %v318 = vunpack.c.l.b16 %v58
  %v319 = vunpack.c.l.b16 %v59
  %v320 = vunpack.c.l.b16 %v60
  %v321 = vunpack.c.l.b16 %v61
  %v322 = vunpack.c.l.b16 %v62
  %v323 = vunpack.c.l.b16 %v63
  %v324 = vunpack.c.l.b16 %v64
  %v325 = vunpack.c.l.b16 %v65
  %v326 = vunpack.c.l.b16 %v66
  %v327 = vunpack.c.l.b16 %v67
  %v328 = vunpack.c.l.b16 %v68
  %v329 = vunpack.c.l.b16 %v69
  %v330 = vunpack.c.l.b16 %v70
  %v331 = vunpack.c.l.b16 %v71
  %v332 = vunpack.c.l.b16 %v72
  %v333 = vunpack.c.l.b16 %v73
  %v334 = vunpack.c.l.b16 %v74
  %v335 = vunpack.c.l.b16 %v75
  %v336 = vunpack.c.l.b16 %v76
  %v337 = vunpack.c.l.b16 %v77
  %v338 = vunpack.c.l.b16 %v78
  %v339 = vunpack.c.l.b16 %v79
  %v340 = vunpack.c.l.b16 %v80
  %v341 = vunpack.c.l.b16 %v81
  %v342 = vunpack.c.l.b16 %v82
  %v343 = vunpack.c.l.b16 %v83
  %v344 = vunpack.c.l.b16 %v84
  %v345 = vunpack.c.l.b16 %v85
  %v346 = vunpack.c.l.b16 %v86
  %v347 = vunpack.c.l.b16 %v87
  %v348 = vunpack.c.l.b16 %v88
  %v349 = vunpack.c.l.b16 %v89
  %v350 = vunpack.c.l.b16 %v90
  %v351 = vunpack.c.l.b16 %v91
  %v352 = vunpack.c.l.b16 %v92
  %v353 = vunpack.c.l.b16 %v93
  %v354 = vunpack.c.l.b16 %v94
  %v355 = vunpack.c.l.b16 %v95
  %v356 = vunpack.c.l.b16 %v96
  %v357 = vunpack.c.l.b16 %v97
  %v358 = vunpack.c.l.b16 %v98
  %v359 = vunpack.c.l.b16 %v99
  %v360 = vunpack.c.l.b16 %v100
  %v361 = vunpack.c.l.b16 %v101
  %v362 = vunpack.c.l.b16 %v102
  %v363 = vunpack.c.l.b16 %v103
  %v364 = vunpack.c.l.b16 %v104
  %v365 = vunpack.c.l.b16 %v105
  %v366 = vunpack.c.l.b16 %v106
  %v367 = vunpack.c.l.b16 %v107
  %v368 = vunpack.c.l.b16 %v108
  %v369 = vunpack.c.l.b16 %v109
  %v370 = vunpack.c.l.b16 %v110
  %v371 = vunpack.c.l.b16 %v111
  %v372 = vunpack.c.l.b16 %v112
  %v373 = vunpack.c.l.b16 %v113
  %v374 = vunpack.c.l.b16 %v114
  %v375 = vunpack.c.l.b16 %v115
  %v376 = vunpack.c.l.b16 %v116
  %v377 = vunpack.c.l.b16 %v117
  %v378 = vunpack.c.l.b16 %v118
  %v379 = vunpack.c.l.b16 %v119
  %v380 = vunpack.c.l.b16 %v120
  %v381 = vunpack.c.l.b16 %v121
  %v382 = vunpack.c.l.b16 %v122
  %v383 = vunpack.c.l.b16 %v123
  %v384 = vunpack.c.l.b16 %v124
  %v385 = vunpack.c.l.b16 %v125
  %v386 = vunpack.c.l.b16 %v126
  %v387 = vunpack.c.l.b16 %v127
  %v388 = vunpack.c.l.b16 %v128
  %v389 = vunpack.c.l.b16 %v129
  %v390 = vunpack.c.l.b16 %v130
  %v391 = vunpack.c.l.b16 %v131
  %v392 = vunpack.c.l.b16 %v132
  %v393 = vunpack.c.l.b16 %v133
  %v394 = vunpack.c.l.b16 %v134
  %v395 = vunpack.c.l.b16 %v135
  %v396 = vunpack.c.l.b16 %v136
  %v397 = vunpack.c.l.b16 %v137
  %v398 = vunpack.c.l.b16 %v138
  %v399 = vunpack.c.l.b16 %v139
  %v400 = vunpack.c.l.b16 %v140
  %v401 = vunpack.c.l.b16 %v141
  %v402 = vunpack.c.l.b16 %v142
  %v403 = vunpack.c.l.b16 %v143
  %v404 = vunpack.c.l.b16 %v144
  %v405 = vunpack.c.l.b16 %v145
  %v406 = vunpack.c.l.b16 %v146
  %v407 = vunpack.c.l.b16 %v147
  %v408 = vunpack.c.l.b16 %v148
  %v409 = vunpack.c.l.b16 %v149
  %v410 = vunpack.c.l.b16 %v150
  %v411 = vpack.c.b16 %v300, %v299
  %v412 = vpack.c.b16 %v302, %v301
  %v413 = vpack.c.b16 %v304, %v303
  %v414 = vpack.c.b16 %v306, %v305
  %v415 = vpack.c.b16 %v308, %v307
  %v416 = vpack.c.b16 %v310, %v309
  %v417 = vpack.c.b16 %v312, %v311
  %v418 = vpack.c.b16 %v314, %v313
  %v419 = vpack.c.b16 %v316, %v315
  %v420 = vpack.c.b16 %v318, %v317
  %v421 = vpack.c.b16 %v320, %v319
  %v422 = vpack.c.b16 %v322, %v321
  %v423 = vpack.c.b16 %v324, %v323
  %v424 = vpack.c.b16 %v326, %v325
  %v425 = vpack.c.b16 %v328, %v327
  %v426 = vpack.c.b16 %v330, %v329
  %v427 = vpack.c.b16 %v332, %v331
  %v428 = vpack.c.b16 %v334, %v333
  %v429 = vpack.c.b16 %v336, %v335
  %v430 = vpack.c.b16 %v338, %v337
  %v431 = vpack.c.b16 %v340, %v339
  %v432 = vpack.c.b16 %v342, %v341
  %v433 = vpack.c.b16 %v344, %v343
  %v434 = vpack.c.b16 %v346, %v345
  %v435 = vpack.c.b16 %v348, %v347
  %v436 = vpack.c.b16 %v350, %v349
  %v437 = vpack.c.b16 %v352, %v351
  %v438 = vpack.c.b16 %v354, %v353
  %v439 = vpack.c.b16 %v356, %v355
  %v440 = vpack.c.b16 %v358, %v357
  %v441 = vpack.c.b16 %v360, %v359
  %v442 = vpack.c.b16 %v362, %v361
  %v443 = vpack.c.b16 %v364, %v363
  %v444 = vpack.c.b16 %v366, %v365
  %v445 = vpack.c.b16 %v368, %v367
  %v446 = vpack.c.b16 %v370, %v369
  %v447 = vpack.c.b16 %v372, %v371
  %v448 = vpack.c.b16 %v374, %v373
  %v449 = vpack.c.b16 %v376, %v375
  %v450 = vpack.c.b16 %v378, %v377
  %v451 = vpack.c.b16 %v380, %v379
  %v452 = vpack.c.b16 %v382, %v381
  %v453 = vpack.c.b16 %v384, %v383
  %v454 = vpack.c.b16 %v386, %v385
  %v455 = vpack.c.b16 %v388, %v387
  %v456 = vpack.c.b16 %v390, %v389
  %v457 = vpack.c.b16 %v392, %v391
  %v458 = vpack.c.b16 %v394, %v393
  %v459 = vpack.c.b16 %v396, %v395
  %v460 = vpack.c.b16 %v398, %v397
  %v461 = vpack.c.b16 %v400, %v399
  %v462 = vpack.c.b16 %v402, %v401
  %v463 = vpack.c.b16 %v404, %v403
  %v464 = vpack.c.b16 %v406, %v405
  %v465 = vpack.c.b16 %v408, %v407
  %v466 = vpack.c.b16 %v410, %v409
  %523 = vmatprep.subr.bf16.mxu0 0
  %524 = vmatpush1.bf16.msra.mxu0 %v418
  %525 = vmatprep.subr.bf16.mxu0 0
  %526 = vmatpush1.bf16.msra.mxu0 %v417
  %527 = vmatprep.subr.bf16.mxu0 0
  %528 = vmatpush1.bf16.msra.mxu0 %v416
  %529 = vmatprep.subr.bf16.mxu0 0
  %530 = vmatpush1.bf16.msra.mxu0 %v415
  %531 = vmatprep.subr.bf16.mxu0 0
  %532 = vmatpush1.bf16.msra.mxu0 %v414
  %533 = vmatprep.subr.bf16.mxu0 0
  %534 = vmatpush1.bf16.msra.mxu0 %v413
  %535 = vmatprep.subr.bf16.mxu0 0
  %536 = vmatpush1.bf16.msra.mxu0 %v412
  %537 = vmatprep.subr.bf16.mxu0 0
  %538 = vmatpush1.bf16.msra.mxu0 %v411
  %539 = vmatprep.subr.bf16.mxu0 0
  %540 = vmatpush2.bf16.msra.mxu0 %v426
  %541 = vmatprep.subr.bf16.mxu0 0
  %542 = vmatpush2.bf16.msra.mxu0 %v425
  %543 = vmatprep.subr.bf16.mxu0 0
  %544 = vmatpush2.bf16.msra.mxu0 %v424
  %545 = vmatprep.subr.bf16.mxu0 0
  %546 = vmatpush2.bf16.msra.mxu0 %v423
  %547 = vmatprep.subr.bf16.mxu0 0
  %548 = vmatpush2.bf16.msra.mxu0 %v422
  %549 = vmatprep.subr.bf16.mxu0 0
  %550 = vmatpush2.bf16.msra.mxu0 %v421
  %551 = vmatprep.subr.bf16.mxu0 0
  %552 = vmatpush2.bf16.msra.mxu0 %v420
  %553 = vmatprep.subr.bf16.mxu0 0
  %554 = vmatpush2.bf16.msra.mxu0 %v419
  %555 = vmatprep.mubr.bf16.mxu0 %v174
  %556 = vmatmul.mubr.bf16.gmra.mxu0 %v173
  %v557 = vpop.f32.mrf.mxu0
  %v558 = vadd.f32 0.0, %v557
  %v559 = vpop.f32.mrf.mxu0
  %v560 = vpop.f32.mrf.mxu0
  %v561 = vadd.f32 0.0, %v560
  %v562 = vpop.f32.mrf.mxu0
  %563 = vdwg.mxu0
  %564 = vmatprep.subr.bf16.mxu0 0
  %565 = vmatpush1.bf16.msra.mxu0 %v434
  %566 = vmatprep.subr.bf16.mxu0 0
  %567 = vmatpush1.bf16.msra.mxu0 %v433
  %568 = vmatprep.subr.bf16.mxu0 0
  %569 = vmatpush1.bf16.msra.mxu0 %v432
  %570 = vmatprep.subr.bf16.mxu0 0
  %571 = vmatpush1.bf16.msra.mxu0 %v431
  %572 = vmatprep.subr.bf16.mxu0 0
  %573 = vmatpush1.bf16.msra.mxu0 %v430
  %574 = vmatprep.subr.bf16.mxu0 0
  %575 = vmatpush1.bf16.msra.mxu0 %v429
  %576 = vmatprep.subr.bf16.mxu0 0
  %577 = vmatpush1.bf16.msra.mxu0 %v428
  %578 = vmatprep.subr.bf16.mxu0 0
  %579 = vmatpush1.bf16.msra.mxu0 %v427
  %580 = vmatprep.subr.bf16.mxu0 0
  %581 = vmatpush2.bf16.msra.mxu0 %v442
  %582 = vmatprep.subr.bf16.mxu0 0
  %583 = vmatpush2.bf16.msra.mxu0 %v441
  %584 = vmatprep.subr.bf16.mxu0 0
  %585 = vmatpush2.bf16.msra.mxu0 %v440
  %586 = vmatprep.subr.bf16.mxu0 0
  %587 = vmatpush2.bf16.msra.mxu0 %v439
  %588 = vmatprep.subr.bf16.mxu0 0
  %589 = vmatpush2.bf16.msra.mxu0 %v438
  %590 = vmatprep.subr.bf16.mxu0 0
  %591 = vmatpush2.bf16.msra.mxu0 %v437
  %592 = vmatprep.subr.bf16.mxu0 0
  %593 = vmatpush2.bf16.msra.mxu0 %v436
  %594 = vmatprep.subr.bf16.mxu0 0
  %595 = vmatpush2.bf16.msra.mxu0 %v435
  %596 = vmatprep.mubr.bf16.mxu0 %v176
  %597 = vmatmul.mubr.bf16.gmra.mxu0 %v175
  %v598 = vpop.f32.mrf.mxu0
  %v599 = vadd.f32 %v558, %v598
  %v600 = vpop.f32.mrf.mxu0
  %v601 = vpop.f32.mrf.mxu0
  %v602 = vadd.f32 %v561, %v601
  %v603 = vpop.f32.mrf.mxu0
  %604 = vdwg.mxu0
  %605 = vmatprep.subr.bf16.mxu0 0
  %606 = vmatpush1.bf16.msra.mxu0 %v450
  %607 = vmatprep.subr.bf16.mxu0 0
  %608 = vmatpush1.bf16.msra.mxu0 %v449
  %609 = vmatprep.subr.bf16.mxu0 0
  %610 = vmatpush1.bf16.msra.mxu0 %v448
  %611 = vmatprep.subr.bf16.mxu0 0
  %612 = vmatpush1.bf16.msra.mxu0 %v447
  %613 = vmatprep.subr.bf16.mxu0 0
  %614 = vmatpush1.bf16.msra.mxu0 %v446
  %615 = vmatprep.subr.bf16.mxu0 0
  %616 = vmatpush1.bf16.msra.mxu0 %v445
  %617 = vmatprep.subr.bf16.mxu0 0
  %618 = vmatpush1.bf16.msra.mxu0 %v444
  %619 = vmatprep.subr.bf16.mxu0 0
  %620 = vmatpush1.bf16.msra.mxu0 %v443
  %621 = vmatprep.subr.bf16.mxu0 0
  %622 = vmatpush2.bf16.msra.mxu0 %v458
  %623 = vmatprep.subr.bf16.mxu0 0
  %624 = vmatpush2.bf16.msra.mxu0 %v457
  %625 = vmatprep.subr.bf16.mxu0 0
  %626 = vmatpush2.bf16.msra.mxu0 %v456
  %627 = vmatprep.subr.bf16.mxu0 0
  %628 = vmatpush2.bf16.msra.mxu0 %v455
  %629 = vmatprep.subr.bf16.mxu0 0
  %630 = vmatpush2.bf16.msra.mxu0 %v454
  %631 = vmatprep.subr.bf16.mxu0 0
  %632 = vmatpush2.bf16.msra.mxu0 %v453
  %633 = vmatprep.subr.bf16.mxu0 0
  %634 = vmatpush2.bf16.msra.mxu0 %v452
  %635 = vmatprep.subr.bf16.mxu0 0
  %636 = vmatpush2.bf16.msra.mxu0 %v451
  %637 = vmatprep.mubr.bf16.mxu0 %v178
  %638 = vmatmul.mubr.bf16.gmra.mxu0 %v177
  %v639 = vpop.f32.mrf.mxu0
  %v640 = vadd.f32 %v599, %v639
  %v641 = vpop.f32.mrf.mxu0
  %v642 = vpop.f32.mrf.mxu0
  %v643 = vadd.f32 %v602, %v642
  %v644 = vpop.f32.mrf.mxu0
  %645 = vdwg.mxu0
  %646 = vmatprep.subr.bf16.mxu0 0
  %647 = vmatpush1.bf16.msra.mxu0 %v466
  %648 = vmatprep.subr.bf16.mxu0 0
  %649 = vmatpush1.bf16.msra.mxu0 %v465
  %650 = vmatprep.subr.bf16.mxu0 0
  %651 = vmatpush1.bf16.msra.mxu0 %v464
  %652 = vmatprep.subr.bf16.mxu0 0
  %653 = vmatpush1.bf16.msra.mxu0 %v463
  %654 = vmatprep.subr.bf16.mxu0 0
  %655 = vmatpush1.bf16.msra.mxu0 %v462
  %656 = vmatprep.subr.bf16.mxu0 0
  %657 = vmatpush1.bf16.msra.mxu0 %v461
  %658 = vmatprep.subr.bf16.mxu0 0
  %659 = vmatpush1.bf16.msra.mxu0 %v460
  %660 = vmatprep.subr.bf16.mxu0 0
  %661 = vmatpush1.bf16.msra.mxu0 %v459
  %662 = vmatprep.subr.bf16.mxu0 0
  %663 = vmatpush2.bf16.msra.mxu0 0
  %664 = vmatprep.subr.bf16.mxu0 0
  %665 = vmatpush2.bf16.msra.mxu0 0
  %666 = vmatprep.subr.bf16.mxu0 0
  %667 = vmatpush2.bf16.msra.mxu0 0
  %668 = vmatprep.subr.bf16.mxu0 0
  %669 = vmatpush2.bf16.msra.mxu0 0
  %670 = vmatprep.subr.bf16.mxu0 0
  %671 = vmatpush2.bf16.msra.mxu0 0
  %672 = vmatprep.subr.bf16.mxu0 0
  %673 = vmatpush2.bf16.msra.mxu0 0
  %674 = vmatprep.subr.bf16.mxu0 0
  %675 = vmatpush2.bf16.msra.mxu0 0
  %676 = vmatprep.subr.bf16.mxu0 0
  %677 = vmatpush2.bf16.msra.mxu0 0
  %678 = vmatprep.mubr.bf16.mxu0 0
  %679 = vmatmul.mubr.bf16.gmra.mxu0 %v179
  %v680 = vpop.f32.mrf.mxu0
  %v681 = vadd.f32 %v640, %v680
  %v682 = vpop.f32.mrf.mxu0
  %v683 = vpop.f32.mrf.mxu0
  %v684 = vadd.f32 %v643, %v683
  %v685 = vpop.f32.mrf.mxu0
  %686 = vdwg.mxu0
  %v687 = vpack.c.bf16 %v684, %v681
  %v688 = vlaneseq
  %v689 = vshrl.u32 %v688, 7
  %v690 = vsub.s32 0, %v689
  %v691 = vrot.slane %v26, %v690
  %v694 = vunpack.c.l.b16 %v24
  %v695 = vunpack.c.l.b16 %v25
  %v696 = vpack.c.b16 %v695, %v694
  %vm697 = vcmask 130048
  %v699 = vsel %vm697, %v696, 0
  %701 = vmatprep.subr.bf16.mxu0 0
  %702 = vmatpush1.bf16.msra.mxu0 0
  %703 = vmatprep.subr.bf16.mxu0 0
  %704 = vmatpush1.bf16.msra.mxu0 0
  %705 = vmatprep.subr.bf16.mxu0 0
  %706 = vmatpush1.bf16.msra.mxu0 0
  %707 = vmatprep.subr.bf16.mxu0 0
  %708 = vmatpush1.bf16.msra.mxu0 0
  %709 = vmatprep.subr.bf16.mxu0 0
  %710 = vmatpush1.bf16.msra.mxu0 0
  %711 = vmatprep.subr.bf16.mxu0 0
  %712 = vmatpush1.bf16.msra.mxu0 0
  %713 = vmatprep.subr.bf16.mxu0 0
  %714 = vmatpush1.bf16.msra.mxu0 0
  %715 = vmatprep.subr.bf16.mxu0 0
  %716 = vmatpush1.bf16.msra.mxu0 %v687
  %717 = vmatprep.subr.bf16.mxu0 0
  %718 = vmatpush2.bf16.msra.mxu0 0
  %719 = vmatprep.subr.bf16.mxu0 0
  %720 = vmatpush2.bf16.msra.mxu0 0
  %721 = vmatprep.subr.bf16.mxu0 0
  %722 = vmatpush2.bf16.msra.mxu0 0
  %723 = vmatprep.subr.bf16.mxu0 0
  %724 = vmatpush2.bf16.msra.mxu0 0
  %725 = vmatprep.subr.bf16.mxu0 0
  %726 = vmatpush2.bf16.msra.mxu0 0
  %727 = vmatprep.subr.bf16.mxu0 0
  %728 = vmatpush2.bf16.msra.mxu0 0
  %729 = vmatprep.subr.bf16.mxu0 0
  %730 = vmatpush2.bf16.msra.mxu0 0
  %731 = vmatprep.subr.bf16.mxu0 0
  %732 = vmatpush2.bf16.msra.mxu0 0
  %733 = vmatprep.mubr.bf16.mxu0 0
  %734 = vmatmul.mubr.bf16.gmra.mxu0 %v699
  %v735 = vpop.f32.mrf.mxu0
  %v736 = vadd.f32 %v691, %v735
  %v737 = vpop.f32.mrf.mxu0
  %v738 = vpop.f32.mrf.mxu0
  %v739 = vadd.f32 %v691, %v738
  %v740 = vpop.f32.mrf.mxu0
  %741 = vdwg.mxu0
  %v742 = vmax.f32 %v736, 0.0
  %v743 = vmax.f32 %v739, 0.0
  %v744 = vpack.c.bf16 %v743, %v742
  %v745 = vld [vmem:[%s3] sm:$0xf]
  %v746 = vld [vmem:[%s3 + $0x4] sm:$0xf]
  %v747 = vld [vmem:[%s3 + $0x8] sm:$0xf]
  %v748 = vld [vmem:[%s3 + $0xc] sm:$0xf]
  %v753 = vunpack.c.l.b16 %v745
  %v754 = vunpack.c.l.b16 %v746
  %v755 = vunpack.c.l.b16 %v747
  %v756 = vunpack.c.l.b16 %v748
  %v757 = vpack.c.b16 %v754, %v753
  %v758 = vpack.c.b16 %v756, %v755
  %vm761 = vcmask 261120
  %v763 = vsel %vm761, %v744, 0
  %765 = vmatprep.subr.bf16.mxu0 0
  %766 = vmatpush1.bf16.msra.mxu0 0
  %767 = vmatprep.subr.bf16.mxu0 0
  %768 = vmatpush1.bf16.msra.mxu0 0
  %769 = vmatprep.subr.bf16.mxu0 0
  %770 = vmatpush1.bf16.msra.mxu0 0
  %771 = vmatprep.subr.bf16.mxu0 0
  %772 = vmatpush1.bf16.msra.mxu0 0
  %773 = vmatprep.subr.bf16.mxu0 0
  %774 = vmatpush1.bf16.msra.mxu0 0
  %775 = vmatprep.subr.bf16.mxu0 0
  %776 = vmatpush1.bf16.msra.mxu0 0
  %777 = vmatprep.subr.bf16.mxu0 0
  %778 = vmatpush1.bf16.msra.mxu0 %v758
  %779 = vmatprep.subr.bf16.mxu0 0
  %780 = vmatpush1.bf16.msra.mxu0 %v757
  %781 = vmatprep.subr.bf16.mxu0 0
  %782 = vmatpush2.bf16.msra.mxu0 0
  %783 = vmatprep.subr.bf16.mxu0 0
  %784 = vmatpush2.bf16.msra.mxu0 0
  %785 = vmatprep.subr.bf16.mxu0 0
  %786 = vmatpush2.bf16.msra.mxu0 0
  %787 = vmatprep.subr.bf16.mxu0 0
  %788 = vmatpush2.bf16.msra.mxu0 0
  %789 = vmatprep.subr.bf16.mxu0 0
  %790 = vmatpush2.bf16.msra.mxu0 0
  %791 = vmatprep.subr.bf16.mxu0 0
  %792 = vmatpush2.bf16.msra.mxu0 0
  %793 = vmatprep.subr.bf16.mxu0 0
  %794 = vmatpush2.bf16.msra.mxu0 0
  %795 = vmatprep.subr.bf16.mxu0 0
  %796 = vmatpush2.bf16.msra.mxu0 0
  %797 = vmatprep.mubr.bf16.mxu0 0
  %798 = vmatmul.mubr.bf16.gmra.mxu0 %v763
  %v799 = vpop.f32.mrf.mxu0
  %v800 = vadd.f32 0.0, %v799
  %v801 = vpop.f32.mrf.mxu0
  %v802 = vpop.f32.mrf.mxu0
  %v803 = vadd.f32 0.0, %v802
  %v804 = vpop.f32.mrf.mxu0
  %805 = vdwg.mxu0
  %v806 = vpack.c.bf16 %v803, %v800
  %v807 = vlaneseq
  %v808 = vshrl.u32 %v807, 7
  %v809 = vsub.s32 0, %v808
  %v810 = vrot.slane %v27, %v809
  %811 = vmatprep.subr.bf16.mxu0 0
  %812 = vmatpush1.bf16.msra.mxu0 0
  %813 = vmatprep.subr.bf16.mxu0 0
  %814 = vmatpush1.bf16.msra.mxu0 0
  %815 = vmatprep.subr.bf16.mxu0 0
  %816 = vmatpush1.bf16.msra.mxu0 0
  %817 = vmatprep.subr.bf16.mxu0 0
  %818 = vmatpush1.bf16.msra.mxu0 0
  %819 = vmatprep.subr.bf16.mxu0 0
  %820 = vmatpush1.bf16.msra.mxu0 0
  %821 = vmatprep.subr.bf16.mxu0 0
  %822 = vmatpush1.bf16.msra.mxu0 0
  %823 = vmatprep.subr.bf16.mxu0 0
  %824 = vmatpush1.bf16.msra.mxu0 0
  %825 = vmatprep.subr.bf16.mxu0 0
  %826 = vmatpush1.bf16.msra.mxu0 %v806
  %827 = vmatprep.subr.bf16.mxu0 0
  %828 = vmatpush2.bf16.msra.mxu0 0
  %829 = vmatprep.subr.bf16.mxu0 0
  %830 = vmatpush2.bf16.msra.mxu0 0
  %831 = vmatprep.subr.bf16.mxu0 0
  %832 = vmatpush2.bf16.msra.mxu0 0
  %833 = vmatprep.subr.bf16.mxu0 0
  %834 = vmatpush2.bf16.msra.mxu0 0
  %835 = vmatprep.subr.bf16.mxu0 0
  %836 = vmatpush2.bf16.msra.mxu0 0
  %837 = vmatprep.subr.bf16.mxu0 0
  %838 = vmatpush2.bf16.msra.mxu0 0
  %839 = vmatprep.subr.bf16.mxu0 0
  %840 = vmatpush2.bf16.msra.mxu0 0
  %841 = vmatprep.subr.bf16.mxu0 0
  %842 = vmatpush2.bf16.msra.mxu0 0
  %843 = vmatprep.mubr.bf16.mxu0 0
  %844 = vmatmul.mubr.bf16.gmra.mxu0 %v699
  %v845 = vpop.f32.mrf.mxu0
  %v846 = vadd.f32 %v810, %v845
  %v847 = vpop.f32.mrf.mxu0
  %v848 = vpop.f32.mrf.mxu0
  %v849 = vadd.f32 %v810, %v848
  %v850 = vpop.f32.mrf.mxu0
  %851 = vdwg.mxu0
  %v852 = vmax.f32 %v846, 0.0
  %v853 = vmax.f32 %v849, 0.0
  %v854 = vpack.c.bf16 %v853, %v852
  %s855 = scalar_lea.vmem %s3, 16
  %v856 = vld [vmem:[%s855] sm:$0xf]
  %v857 = vld [vmem:[%s855 + $0x4] sm:$0xf]
  %v858 = vld [vmem:[%s855 + $0x8] sm:$0xf]
  %v859 = vld [vmem:[%s855 + $0xc] sm:$0xf]
  %v864 = vunpack.c.l.b16 %v856
  %v865 = vunpack.c.l.b16 %v857
  %v866 = vunpack.c.l.b16 %v858
  %v867 = vunpack.c.l.b16 %v859
  %v868 = vpack.c.b16 %v865, %v864
  %v869 = vpack.c.b16 %v867, %v866
  %v873 = vsel %vm761, %v854, 0
  %875 = vmatprep.subr.bf16.mxu0 0
  %876 = vmatpush1.bf16.msra.mxu0 0
  %877 = vmatprep.subr.bf16.mxu0 0
  %878 = vmatpush1.bf16.msra.mxu0 0
  %879 = vmatprep.subr.bf16.mxu0 0
  %880 = vmatpush1.bf16.msra.mxu0 0
  %881 = vmatprep.subr.bf16.mxu0 0
  %882 = vmatpush1.bf16.msra.mxu0 0
  %883 = vmatprep.subr.bf16.mxu0 0
  %884 = vmatpush1.bf16.msra.mxu0 0
  %885 = vmatprep.subr.bf16.mxu0 0
  %886 = vmatpush1.bf16.msra.mxu0 0
  %887 = vmatprep.subr.bf16.mxu0 0
  %888 = vmatpush1.bf16.msra.mxu0 %v869
  %889 = vmatprep.subr.bf16.mxu0 0
  %890 = vmatpush1.bf16.msra.mxu0 %v868
  %891 = vmatprep.subr.bf16.mxu0 0
  %892 = vmatpush2.bf16.msra.mxu0 0
  %893 = vmatprep.subr.bf16.mxu0 0
  %894 = vmatpush2.bf16.msra.mxu0 0
  %895 = vmatprep.subr.bf16.mxu0 0
  %896 = vmatpush2.bf16.msra.mxu0 0
  %897 = vmatprep.subr.bf16.mxu0 0
  %898 = vmatpush2.bf16.msra.mxu0 0
  %899 = vmatprep.subr.bf16.mxu0 0
  %900 = vmatpush2.bf16.msra.mxu0 0
  %901 = vmatprep.subr.bf16.mxu0 0
  %902 = vmatpush2.bf16.msra.mxu0 0
  %903 = vmatprep.subr.bf16.mxu0 0
  %904 = vmatpush2.bf16.msra.mxu0 0
  %905 = vmatprep.subr.bf16.mxu0 0
  %906 = vmatpush2.bf16.msra.mxu0 0
  %907 = vmatprep.mubr.bf16.mxu0 0
  %908 = vmatmul.mubr.bf16.gmra.mxu0 %v873
  %v909 = vpop.f32.mrf.mxu0
  %v910 = vadd.f32 0.0, %v909
  %v911 = vpop.f32.mrf.mxu0
  %v912 = vpop.f32.mrf.mxu0
  %v913 = vadd.f32 0.0, %v912
  %v914 = vpop.f32.mrf.mxu0
  %915 = vdwg.mxu0
  %v916 = vpack.c.bf16 %v913, %v910
  %v917 = vlaneseq
  %v918 = vshrl.u32 %v917, 7
  %v919 = vsub.s32 0, %v918
  %v920 = vrot.slane %v28, %v919
  %921 = vmatprep.subr.bf16.mxu0 0
  %922 = vmatpush1.bf16.msra.mxu0 0
  %923 = vmatprep.subr.bf16.mxu0 0
  %924 = vmatpush1.bf16.msra.mxu0 0
  %925 = vmatprep.subr.bf16.mxu0 0
  %926 = vmatpush1.bf16.msra.mxu0 0
  %927 = vmatprep.subr.bf16.mxu0 0
  %928 = vmatpush1.bf16.msra.mxu0 0
  %929 = vmatprep.subr.bf16.mxu0 0
  %930 = vmatpush1.bf16.msra.mxu0 0
  %931 = vmatprep.subr.bf16.mxu0 0
  %932 = vmatpush1.bf16.msra.mxu0 0
  %933 = vmatprep.subr.bf16.mxu0 0
  %934 = vmatpush1.bf16.msra.mxu0 0
  %935 = vmatprep.subr.bf16.mxu0 0
  %936 = vmatpush1.bf16.msra.mxu0 %v916
  %937 = vmatprep.subr.bf16.mxu0 0
  %938 = vmatpush2.bf16.msra.mxu0 0
  %939 = vmatprep.subr.bf16.mxu0 0
  %940 = vmatpush2.bf16.msra.mxu0 0
  %941 = vmatprep.subr.bf16.mxu0 0
  %942 = vmatpush2.bf16.msra.mxu0 0
  %943 = vmatprep.subr.bf16.mxu0 0
  %944 = vmatpush2.bf16.msra.mxu0 0
  %945 = vmatprep.subr.bf16.mxu0 0
  %946 = vmatpush2.bf16.msra.mxu0 0
  %947 = vmatprep.subr.bf16.mxu0 0
  %948 = vmatpush2.bf16.msra.mxu0 0
  %949 = vmatprep.subr.bf16.mxu0 0
  %950 = vmatpush2.bf16.msra.mxu0 0
  %951 = vmatprep.subr.bf16.mxu0 0
  %952 = vmatpush2.bf16.msra.mxu0 0
  %953 = vmatprep.mubr.bf16.mxu0 0
  %954 = vmatmul.mubr.bf16.gmra.mxu0 %v699
  %v955 = vpop.f32.mrf.mxu0
  %v956 = vadd.f32 %v920, %v955
  %v957 = vpop.f32.mrf.mxu0
  %v958 = vpop.f32.mrf.mxu0
  %v959 = vadd.f32 %v920, %v958
  %v960 = vpop.f32.mrf.mxu0
  %961 = vdwg.mxu0
  %v962 = vld [vmem:[%s5] sm:$0x3]
  %v963 = vlaneseq
  %v964 = vshrl.u32 %v963, 7
  %v965 = vsub.s32 0, %v964
  %v966 = vrot.slane %v962, %v965
  %968 = vbcast.lane.b32.xlu0 %v966, 256
  %v969 = vpop.permute.xlu0 %968
  %s971 = sor.u32 256, 8
  %972 = vbcast.lane.b32.xlu0 %v966, %s971
  %v973 = vpop.permute.xlu0 %972
  %v974 = vlaneseq
  %v975 = vshrl.u32 %v974, 7
  %v976 = vsub.s32 1, %v975
  %v977 = vrot.slane %v962, %v976
  %979 = vbcast.lane.b32.xlu0 %v977, 256
  %v980 = vpop.permute.xlu0 %979
  %s982 = sor.u32 256, 8
  %983 = vbcast.lane.b32.xlu0 %v977, %s982
  %v984 = vpop.permute.xlu0 %983
  %vm985 = vcmp.gt.f32.partialorder %v969, 0.5
  %vm986 = vcmp.gt.f32.partialorder %v973, 0.5
  %vm987 = vcmp.gt.f32.partialorder %v980, 0.5
  %vm988 = vcmp.gt.f32.partialorder %v984, 0.5
  %v989 = vsel %vm985, 1, 0
  %v990 = vsel %vm986, 1, 0
  %v991 = vsel %vm987, 1, 0
  %v992 = vsel %vm988, 1, 0
  %vm993 = vcmp.eq.s32.totalorder %v989, 1
  %vm994 = vcmp.eq.s32.totalorder %v990, 1
  %vm995 = vcmp.eq.s32.totalorder %v991, 1
  %vm996 = vcmp.eq.s32.totalorder %v992, 1
  %v997 = vsel %vm993, %v956, -3.4028235e+38
  %v998 = vsel %vm994, %v959, -3.4028235e+38
  %v999 = vsel %vm995, %v956, -3.4028235e+38
  %v1000 = vsel %vm996, %v959, -3.4028235e+38
  %v1001 = vsel %vm761, %v997, -inf
  %v1002 = vsel %vm761, %v998, -inf
  %v1003 = vmax.f32 %v1001, %v1002
  %v1004 = vrot.slane %v1003, 4
  %v1005 = vmax.f32 %v1003, %v1004
  %v1006 = vrot.slane %v1005, 2
  %v1007 = vmax.f32 %v1005, %v1006
  %v1008 = vrot.slane %v1007, 1
  %v1009 = vmax.f32 %v1007, %v1008
  %v1010 = vsel %vm761, %v999, -inf
  %v1011 = vsel %vm761, %v1000, -inf
  %v1012 = vmax.f32 %v1010, %v1011
  %v1013 = vrot.slane %v1012, 4
  %v1014 = vmax.f32 %v1012, %v1013
  %v1015 = vrot.slane %v1014, 2
  %v1016 = vmax.f32 %v1014, %v1015
  %v1017 = vrot.slane %v1016, 1
  %v1018 = vmax.f32 %v1016, %v1017
  %v1019 = vlaneseq
  %v1020 = vshrl.u32 %v1019, 7
  %v1021 = vsub.s32 0, %v1020
  %v1022 = vrot.slane %v29, %v1021
  %v1023 = vmul.f32 %v1009, %v1022
  %v1024 = vmul.f32 %v1018, %v1022
  %v1027 = vrot.slane %v1024, 7
  %vm1028 = vcmask 1041409
  %v1029 = vsel %vm1028, %v1027, %v1023
  %vm1031 = vcmask 254976
  %v1032 = vsel %vm1031, %v1029, 0.0
  %1033 = vadd.xlane.f32.xlu0 %v1032
  %v1034 = vpop.xlane.xlu0 %1033
  %v1035 = vlaneseq
  %v1036 = vshrl.u32 %v1035, 7
  %v1037 = vsub.s32 0, %v1036
  %v1038 = vrot.slane %v30, %v1037
  %v1039 = vadd.f32 %v1034, %v1038
  %vm1040 = vcmask 1024
  %1041 = vst.msk [vmem:[%s6] sm:$0x3] %vm1040, %v1039
  // Predicated region
  $region26: #{tpu_custom_call.1} parent=0 // pred_check
    _
  $region27: #{tpu_custom_call.1} parent=0 // pred_check_branch
    %1043 = sbr.rel (0) target = $region29
  $region28: #{tpu_custom_call.1} parent=0 // pred_region
    _
  $region29: #{tpu_custom_call.1} parent=0 // pred_fallthru
    _
  // Predicated region
  $region30: #{tpu_custom_call.1} parent=0 // pred_check
    _
  $region31: #{tpu_custom_call.1} parent=0 // pred_check_branch
    %1045 = sbr.rel (0) target = $region33
  $region32: #{tpu_custom_call.1} parent=0 // pred_region
    _
  $region33: #{tpu_custom_call.1} parent=0 // pred_fallthru
    _

</llo_original>
